<compile_context>
chip_gen: v7x
topology: tpu7x:2x2x1
jax: 0.10.0
libtpu: 0.0.40
codegen_flags: <defaults>
</compile_context>

<pallas_src>
import functools
import math

import numpy as np
import jax
import jax.numpy as jnp
from jax.experimental import pallas as pl
from jax.experimental.pallas import tpu as pltpu

LOG2PI = math.log(2.0 * math.pi)


def _recip(x):
    """Approx EUP reciprocal + one Newton step (~f32 accuracy, no long VPU divide)."""
    r = pl.reciprocal(x, approx=True)
    return r * (2.0 - x * r)


def _gmre_kernel(hd_ref, w_ref, b_ref, norm_ref, loss_ref, *,
                 inv_first_denom, inv_batch):
    hd = hd_ref[...]                       # (R, N) f32, R = B*C
    w = w_ref[...]                         # (N, 3K)  [alpha | sigma | mu]
    bias = b_ref[...]                      # (1, 3K)
    R, N = hd.shape
    K = bias.shape[-1] // 3

    # Fused 1x1 Conv1d projections: one MXU push instead of three.
    proj = jnp.dot(hd, w, preferred_element_type=jnp.float32) + bias    # (R, 3K)
    a_logit = proj[:, 0:K]
    s_raw = proj[:, K:2 * K]               # log(sigma); sigma itself is never needed
    mu = proj[:, 2 * K:3 * K]

    # log-softmax over K on the tiny (R, K) block.
    a_shift = a_logit - jnp.max(a_logit, axis=-1, keepdims=True)
    a_exp = jnp.exp(a_shift)
    sum_exp = jnp.sum(a_exp, axis=-1, keepdims=True)
    log_alphas = a_shift - jnp.log(sum_exp)            # (R, K)
    alphas = a_exp / sum_exp                           # (R, K)

    inv_sigma = jnp.exp(-s_raw)                        # (R, K)  == 1/sigma
    # Per-component additive constants fused once on the small block so the unrolled
    # loop needs fewer (R,1)->(R,N) lane broadcasts:
    lc_const = -s_raw - 0.5 * LOG2PI                   # log_comp_k = lc_const_k - z²/2
    lp_const = lc_const + log_alphas                   # log_prob_k = lp_const_k - z²/2

    # Statically unrolled K loop; every big op below is (R, N) with N lane-dense.
    sum_p = None        # sum_k exp(log_prob_k)   (unstabilized, reference-faithful)
    acc_plc = None      # sum_k exp(log_prob_k) * log_comp_k
    best_lp = None      # running max_k log_prob_k (same argmax as over wlp)
    best_inv = None     # inv_sigma of winning component
    mean_lp = []        # per-k mean over N of log_prob_k (for q_z)

    for k in range(K):
        inv_b = jnp.broadcast_to(inv_sigma[:, k:k + 1], (R, N))   # reused: z and select
        z = (hd - mu[:, k:k + 1]) * inv_b
        half_z2 = 0.5 * z * z
        log_comp_k = lc_const[:, k:k + 1] - half_z2
        log_prob_k = lp_const[:, k:k + 1] - half_z2
        p_k = jnp.exp(log_prob_k)
        plc_k = p_k * log_comp_k
        mean_lp.append(jnp.mean(log_prob_k, axis=-1, keepdims=True))   # (R, 1)

        if k == 0:
            sum_p, acc_plc = p_k, plc_k
            best_lp, best_inv = log_prob_k, inv_b
        else:
            sum_p = sum_p + p_k
            acc_plc = acc_plc + plc_k
            take = log_prob_k > best_lp            # strict >: first maximal index wins
            best_lp = jnp.where(take, log_prob_k, best_lp)
            best_inv = jnp.where(take, inv_b, best_inv)

    # Reference uses an UNstabilized log(sum(exp(.))) -- reproduce it exactly.
    log_sum_p = jnp.log(sum_p)                                        # (R, N)

    # cluster_norm: the reference aliases new_mu = new_sigma = labels, so both end up
    # holding sigma[label]; norm = (hd - sig)/(sig + 1e-5).  Rewritten in terms of the
    # already-broadcast inv_sigma[label]:  (hd - 1/i)/(1/i + 1e-5) == (hd*i - 1)/(1 + 1e-5*i)
    norm_ref[...] = (hd * best_inv - 1.0) * _recip(1.0 + 1e-5 * best_inv)

    # Loss, finished in-kernel (single SMEM scalar output).
    # first_item = mean_{b,c,N,K} exp(wlp)*log_comp = sum(acc_plc / sum_p) / (R*N*K)
    first_sum = jnp.sum(acc_plc * _recip(sum_p))

    mean_lsp = jnp.mean(log_sum_p, axis=-1, keepdims=True)            # (R, 1)
    kl = 0.0
    for k in range(K):
        q_z_k = mean_lp[k] - mean_lsp                                 # mean_N(wlp_k)
        kl = kl + jnp.sum(alphas[:, k:k + 1] * (log_alphas[:, k:k + 1] - q_z_k))

    # loss = KL/B - first_item   (F.kl_div batchmean; torch.mean over (b,c,N,K))
    loss_ref[0] = kl * inv_batch - first_sum * inv_first_denom


def fuse_gmre_params(wa_t, ba, ws_t, bs, wm_t, bm):
    """Fuse the three 1x1-conv weight/bias sets ONCE, outside the per-call path."""
    w_all = jnp.concatenate([wa_t, ws_t, wm_t], axis=1).astype(jnp.float32)   # (N, 3K)
    b_all = jnp.concatenate([ba, bs, bm], axis=1).astype(jnp.float32)         # (1, 3K)
    return w_all, b_all


def gmre_forward(x, w_all, b_all):
    B, C, S, L, T = x.shape
    N = S * L * T
    K = w_all.shape[1] // 3
    R = B * C

    hd = x.reshape(R, N).astype(jnp.float32)

    # TODO(synk): if B*C (instances) or N grows beyond a few MB of VMEM, add a
    # row-tiled "parallel" grid axis over R with per-tile loss partials — that is the
    # batching escape hatch (and lets v7x shard rows across its 2 TensorCores).
    kernel = functools.partial(
        _gmre_kernel,
        inv_first_denom=1.0 / float(R * N * K),   # torch.mean over (b,c,N,K)
        inv_batch=1.0 / float(B),                 # F.kl_div(..., reduction='batchmean')
    )

    norm, loss = pl.pallas_call(
        kernel,
        in_specs=[
            pl.BlockSpec(memory_space=pltpu.MemorySpace.VMEM),   # hd (whole problem)
            pl.BlockSpec(memory_space=pltpu.MemorySpace.VMEM),   # fused weights
            pl.BlockSpec(memory_space=pltpu.MemorySpace.VMEM),   # fused biases
        ],
        out_specs=[
            pl.BlockSpec(memory_space=pltpu.MemorySpace.VMEM),   # norm
            pl.BlockSpec(memory_space=pltpu.MemorySpace.SMEM),   # loss scalar
        ],
        out_shape=[
            jax.ShapeDtypeStruct((R, N), jnp.float32),
            jax.ShapeDtypeStruct((1,), jnp.float32),
        ],
    )(hd, w_all, b_all)

    return norm.reshape(B, C, S, L, T), loss[0]


def gmre_reference(x, params):
    """Pure-JAX replica of the PyTorch forward (for validation)."""
    wa_t, ba, ws_t, bs, wm_t, bm = params
    B, C, S, L, T = x.shape
    N = S * L * T
    hd = x.reshape(B, C, N).astype(jnp.float32)

    a_logit = jnp.einsum("bcn,nk->bck", hd, wa_t) + ba
    alphas = jax.nn.softmax(a_logit, axis=-1)
    sigma = jnp.exp(jnp.einsum("bcn,nk->bck", hd, ws_t) + bs)
    mu = jnp.einsum("bcn,nk->bck", hd, wm_t) + bm

    log_comp = (-jnp.log(sigma[:, :, None, :]) - 0.5 * LOG2PI
                - 0.5 * ((hd[..., None] - mu[:, :, None, :]) / sigma[:, :, None, :]) ** 2)
    log_prob = log_comp + jnp.log(alphas)[:, :, None, :]
    log_sum = jnp.log(jnp.sum(jnp.exp(log_prob), axis=-1, keepdims=True))
    wlp = log_prob - log_sum
    label = jnp.argmax(wlp, axis=-1)
    sig_gath = jnp.take_along_axis(sigma, label, axis=-1)
    norm = (hd - sig_gath) / (sig_gath + 1e-5)     # aliasing bug: mu replaced by sigma

    first_item = jnp.mean(jnp.exp(wlp) * log_comp)
    q_z = jnp.mean(wlp, axis=2)
    kl = jnp.sum(alphas * (jnp.log(alphas) - q_z)) / B
    loss = kl - first_item
    return norm.reshape(B, C, S, L, T), loss


if __name__ == "__main__":
    # Module hyper-params: num_comp=4, channels=4, num_nodes=4, num_source=2,
    # n_his=9, dilation=2  ->  time = 8, in_features N = 2*4*8 = 64.
    B, C = 2, 4
    S, L, T = 2, 4, 8
    N = S * L * T
    K = 4

    key = jax.random.PRNGKey(0)
    ks = jax.random.split(key, 7)
    bound = 1.0 / math.sqrt(N)
    wa = jax.random.uniform(ks[0], (K, N), jnp.float32, -bound, bound)
    ba = jax.random.uniform(ks[1], (1, K), jnp.float32, -bound, bound)
    wsg = jax.random.uniform(ks[2], (K, N), jnp.float32, -bound, bound)
    bsg = jax.random.uniform(ks[3], (1, K), jnp.float32, -bound, bound)
    wmu = jax.random.uniform(ks[4], (K, N), jnp.float32, -bound, bound)
    bmu = jax.random.uniform(ks[5], (1, K), jnp.float32, -bound, bound)
    x = jax.random.normal(ks[6], (B, C, S, L, T), jnp.float32)

    params = (wa.T, ba, wsg.T, bsg, wmu.T, bmu)
    # Fused weights/biases built ONCE (hoisted out of the per-call / jit path).
    w_all, b_all = fuse_gmre_params(*params)

    out, loss = jax.jit(gmre_forward)(x, w_all, b_all)
    out = jax.block_until_ready(out)
    loss = jax.block_until_ready(loss)

    out_ref, loss_ref = gmre_reference(x, params)
    assert out.shape == (B, C, S, L, T)
    assert np.allclose(np.asarray(out), np.asarray(out_ref), rtol=1e-3, atol=1e-3)
    assert np.allclose(float(loss), float(loss_ref), rtol=1e-3, atol=1e-3)

    print("KERNEL_OK")
</pallas_src>

<mosaic_0001>
module attributes {stable_mosaic.version = 11 : i64} {
  func.func @_gmre_kernel(%arg0: memref<8x64xf32, #tpu.memory_space<vmem>>, %arg1: memref<64x12xf32, #tpu.memory_space<vmem>>, %arg2: memref<1x12xf32, #tpu.memory_space<vmem>>, %arg3: memref<8x64xf32, #tpu.memory_space<vmem>>, %arg4: memref<1xf32, #tpu.memory_space<smem>>) attributes {dimension_semantics = [], scalar_prefetch = 0 : i64, scratch_operands = 0 : i64, tpu.core_type = #tpu.core_type<tc>} {
    %c0 = arith.constant 0 : index
    %c0_0 = arith.constant 0 : index
    %0 = vector.load %arg0[%c0, %c0_0] : memref<8x64xf32, #tpu.memory_space<vmem>>, vector<8x64xf32>
    %c0_1 = arith.constant 0 : index
    %c0_2 = arith.constant 0 : index
    %1 = vector.load %arg1[%c0_1, %c0_2] : memref<64x12xf32, #tpu.memory_space<vmem>>, vector<64x12xf32>
    %c0_3 = arith.constant 0 : index
    %c0_4 = arith.constant 0 : index
    %2 = vector.load %arg2[%c0_3, %c0_4] : memref<1x12xf32, #tpu.memory_space<vmem>>, vector<1x12xf32>
    %cst = arith.constant dense<0.000000e+00> : vector<8x12xf32>
    %3 = tpu.matmul %0, %1, %cst {dimension_numbers = #tpu.dot_dimension_numbers<[1], [0], [0], [1], [0, 0, 1, 1], [], []>} : vector<8x64xf32>, vector<64x12xf32>, vector<8x12xf32> -> vector<8x12xf32>
    %4 = vector.broadcast %2 : vector<1x12xf32> to vector<8x12xf32>
    %5 = arith.addf %3, %4 : vector<8x12xf32>
    %6 = vector.extract_strided_slice %5 {offsets = [0, 0], sizes = [8, 4], strides = [1, 1]} : vector<8x12xf32> to vector<8x4xf32>
    %7 = vector.extract_strided_slice %5 {offsets = [0, 4], sizes = [8, 4], strides = [1, 1]} : vector<8x12xf32> to vector<8x4xf32>
    %8 = vector.extract_strided_slice %5 {offsets = [0, 8], sizes = [8, 4], strides = [1, 1]} : vector<8x12xf32> to vector<8x4xf32>
    %cst_5 = arith.constant dense<0xFF800000> : vector<8xf32>
    %9 = vector.multi_reduction <maximumf>, %6, %cst_5 [1] : vector<8x4xf32> to vector<8xf32>
    %10 = vector.shape_cast %9 : vector<8xf32> to vector<8x1xf32>
    %11 = vector.broadcast %10 : vector<8x1xf32> to vector<8x4xf32>
    %12 = arith.subf %6, %11 : vector<8x4xf32>
    %13 = math.exp %12 : vector<8x4xf32>
    %cst_6 = arith.constant dense<0.000000e+00> : vector<8xf32>
    %14 = vector.multi_reduction <add>, %13, %cst_6 [1] : vector<8x4xf32> to vector<8xf32>
    %15 = vector.shape_cast %14 : vector<8xf32> to vector<8x1xf32>
    %16 = math.log %15 : vector<8x1xf32>
    %17 = vector.broadcast %16 : vector<8x1xf32> to vector<8x4xf32>
    %18 = arith.subf %12, %17 : vector<8x4xf32>
    %19 = vector.broadcast %15 : vector<8x1xf32> to vector<8x4xf32>
    %20 = arith.divf %13, %19 : vector<8x4xf32>
    %cst_7 = arith.constant 0.000000e+00 : f32
    %21 = vector.broadcast %cst_7 : f32 to vector<8x4xf32>
    %22 = arith.subf %21, %7 : vector<8x4xf32>
    %23 = math.exp %22 : vector<8x4xf32>
    %cst_8 = arith.constant 0.000000e+00 : f32
    %24 = vector.broadcast %cst_8 : f32 to vector<8x4xf32>
    %25 = arith.subf %24, %7 : vector<8x4xf32>
    %cst_9 = arith.constant 0.918938517 : f32
    %26 = vector.broadcast %cst_9 : f32 to vector<8x4xf32>
    %27 = arith.subf %25, %26 : vector<8x4xf32>
    %28 = arith.addf %27, %18 : vector<8x4xf32>
    %29 = vector.extract_strided_slice %23 {offsets = [0, 0], sizes = [8, 1], strides = [1, 1]} : vector<8x4xf32> to vector<8x1xf32>
    %30 = vector.shape_cast %29 : vector<8x1xf32> to vector<8x1xf32>
    %31 = vector.broadcast %30 : vector<8x1xf32> to vector<8x64xf32>
    %32 = vector.extract_strided_slice %8 {offsets = [0, 0], sizes = [8, 1], strides = [1, 1]} : vector<8x4xf32> to vector<8x1xf32>
    %33 = vector.broadcast %32 : vector<8x1xf32> to vector<8x64xf32>
    %34 = arith.subf %0, %33 : vector<8x64xf32>
    %35 = arith.mulf %34, %31 : vector<8x64xf32>
    %cst_10 = arith.constant 5.000000e-01 : f32
    %36 = vector.broadcast %cst_10 : f32 to vector<8x64xf32>
    %37 = arith.mulf %36, %35 : vector<8x64xf32>
    %38 = arith.mulf %37, %35 : vector<8x64xf32>
    %39 = vector.extract_strided_slice %27 {offsets = [0, 0], sizes = [8, 1], strides = [1, 1]} : vector<8x4xf32> to vector<8x1xf32>
    %40 = vector.broadcast %39 : vector<8x1xf32> to vector<8x64xf32>
    %41 = arith.subf %40, %38 : vector<8x64xf32>
    %42 = vector.extract_strided_slice %28 {offsets = [0, 0], sizes = [8, 1], strides = [1, 1]} : vector<8x4xf32> to vector<8x1xf32>
    %43 = vector.broadcast %42 : vector<8x1xf32> to vector<8x64xf32>
    %44 = arith.subf %43, %38 : vector<8x64xf32>
    %45 = math.exp %44 : vector<8x64xf32>
    %46 = arith.mulf %45, %41 : vector<8x64xf32>
    %cst_11 = arith.constant dense<0.000000e+00> : vector<8xf32>
    %47 = vector.multi_reduction <add>, %44, %cst_11 [1] : vector<8x64xf32> to vector<8xf32>
    %48 = vector.shape_cast %47 : vector<8xf32> to vector<8x1xf32>
    %cst_12 = arith.constant 6.400000e+01 : f32
    %49 = vector.broadcast %cst_12 : f32 to vector<8x1xf32>
    %50 = arith.divf %48, %49 : vector<8x1xf32>
    %51 = vector.extract_strided_slice %23 {offsets = [0, 1], sizes = [8, 1], strides = [1, 1]} : vector<8x4xf32> to vector<8x1xf32>
    %52 = vector.shape_cast %51 : vector<8x1xf32> to vector<8x1xf32>
    %53 = vector.broadcast %52 : vector<8x1xf32> to vector<8x64xf32>
    %54 = vector.extract_strided_slice %8 {offsets = [0, 1], sizes = [8, 1], strides = [1, 1]} : vector<8x4xf32> to vector<8x1xf32>
    %55 = vector.broadcast %54 : vector<8x1xf32> to vector<8x64xf32>
    %56 = arith.subf %0, %55 : vector<8x64xf32>
    %57 = arith.mulf %56, %53 : vector<8x64xf32>
    %cst_13 = arith.constant 5.000000e-01 : f32
    %58 = vector.broadcast %cst_13 : f32 to vector<8x64xf32>
    %59 = arith.mulf %58, %57 : vector<8x64xf32>
    %60 = arith.mulf %59, %57 : vector<8x64xf32>
    %61 = vector.extract_strided_slice %27 {offsets = [0, 1], sizes = [8, 1], strides = [1, 1]} : vector<8x4xf32> to vector<8x1xf32>
    %62 = vector.broadcast %61 : vector<8x1xf32> to vector<8x64xf32>
    %63 = arith.subf %62, %60 : vector<8x64xf32>
    %64 = vector.extract_strided_slice %28 {offsets = [0, 1], sizes = [8, 1], strides = [1, 1]} : vector<8x4xf32> to vector<8x1xf32>
    %65 = vector.broadcast %64 : vector<8x1xf32> to vector<8x64xf32>
    %66 = arith.subf %65, %60 : vector<8x64xf32>
    %67 = math.exp %66 : vector<8x64xf32>
    %68 = arith.mulf %67, %63 : vector<8x64xf32>
    %cst_14 = arith.constant dense<0.000000e+00> : vector<8xf32>
    %69 = vector.multi_reduction <add>, %66, %cst_14 [1] : vector<8x64xf32> to vector<8xf32>
    %70 = vector.shape_cast %69 : vector<8xf32> to vector<8x1xf32>
    %cst_15 = arith.constant 6.400000e+01 : f32
    %71 = vector.broadcast %cst_15 : f32 to vector<8x1xf32>
    %72 = arith.divf %70, %71 : vector<8x1xf32>
    %73 = arith.addf %45, %67 : vector<8x64xf32>
    %74 = arith.addf %46, %68 : vector<8x64xf32>
    %75 = arith.cmpf ogt, %66, %44 : vector<8x64xf32>
    %76 = arith.select %75, %66, %44 : vector<8x64xi1>, vector<8x64xf32>
    %77 = arith.select %75, %53, %31 : vector<8x64xi1>, vector<8x64xf32>
    %78 = vector.extract_strided_slice %23 {offsets = [0, 2], sizes = [8, 1], strides = [1, 1]} : vector<8x4xf32> to vector<8x1xf32>
    %79 = vector.shape_cast %78 : vector<8x1xf32> to vector<8x1xf32>
    %80 = vector.broadcast %79 : vector<8x1xf32> to vector<8x64xf32>
    %81 = vector.extract_strided_slice %8 {offsets = [0, 2], sizes = [8, 1], strides = [1, 1]} : vector<8x4xf32> to vector<8x1xf32>
    %82 = vector.broadcast %81 : vector<8x1xf32> to vector<8x64xf32>
    %83 = arith.subf %0, %82 : vector<8x64xf32>
    %84 = arith.mulf %83, %80 : vector<8x64xf32>
    %cst_16 = arith.constant 5.000000e-01 : f32
    %85 = vector.broadcast %cst_16 : f32 to vector<8x64xf32>
    %86 = arith.mulf %85, %84 : vector<8x64xf32>
    %87 = arith.mulf %86, %84 : vector<8x64xf32>
    %88 = vector.extract_strided_slice %27 {offsets = [0, 2], sizes = [8, 1], strides = [1, 1]} : vector<8x4xf32> to vector<8x1xf32>
    %89 = vector.broadcast %88 : vector<8x1xf32> to vector<8x64xf32>
    %90 = arith.subf %89, %87 : vector<8x64xf32>
    %91 = vector.extract_strided_slice %28 {offsets = [0, 2], sizes = [8, 1], strides = [1, 1]} : vector<8x4xf32> to vector<8x1xf32>
    %92 = vector.broadcast %91 : vector<8x1xf32> to vector<8x64xf32>
    %93 = arith.subf %92, %87 : vector<8x64xf32>
    %94 = math.exp %93 : vector<8x64xf32>
    %95 = arith.mulf %94, %90 : vector<8x64xf32>
    %cst_17 = arith.constant dense<0.000000e+00> : vector<8xf32>
    %96 = vector.multi_reduction <add>, %93, %cst_17 [1] : vector<8x64xf32> to vector<8xf32>
    %97 = vector.shape_cast %96 : vector<8xf32> to vector<8x1xf32>
    %cst_18 = arith.constant 6.400000e+01 : f32
    %98 = vector.broadcast %cst_18 : f32 to vector<8x1xf32>
    %99 = arith.divf %97, %98 : vector<8x1xf32>
    %100 = arith.addf %73, %94 : vector<8x64xf32>
    %101 = arith.addf %74, %95 : vector<8x64xf32>
    %102 = arith.cmpf ogt, %93, %76 : vector<8x64xf32>
    %103 = arith.select %102, %93, %76 : vector<8x64xi1>, vector<8x64xf32>
    %104 = arith.select %102, %80, %77 : vector<8x64xi1>, vector<8x64xf32>
    %105 = vector.extract_strided_slice %23 {offsets = [0, 3], sizes = [8, 1], strides = [1, 1]} : vector<8x4xf32> to vector<8x1xf32>
    %106 = vector.shape_cast %105 : vector<8x1xf32> to vector<8x1xf32>
    %107 = vector.broadcast %106 : vector<8x1xf32> to vector<8x64xf32>
    %108 = vector.extract_strided_slice %8 {offsets = [0, 3], sizes = [8, 1], strides = [1, 1]} : vector<8x4xf32> to vector<8x1xf32>
    %109 = vector.broadcast %108 : vector<8x1xf32> to vector<8x64xf32>
    %110 = arith.subf %0, %109 : vector<8x64xf32>
    %111 = arith.mulf %110, %107 : vector<8x64xf32>
    %cst_19 = arith.constant 5.000000e-01 : f32
    %112 = vector.broadcast %cst_19 : f32 to vector<8x64xf32>
    %113 = arith.mulf %112, %111 : vector<8x64xf32>
    %114 = arith.mulf %113, %111 : vector<8x64xf32>
    %115 = vector.extract_strided_slice %27 {offsets = [0, 3], sizes = [8, 1], strides = [1, 1]} : vector<8x4xf32> to vector<8x1xf32>
    %116 = vector.broadcast %115 : vector<8x1xf32> to vector<8x64xf32>
    %117 = arith.subf %116, %114 : vector<8x64xf32>
    %118 = vector.extract_strided_slice %28 {offsets = [0, 3], sizes = [8, 1], strides = [1, 1]} : vector<8x4xf32> to vector<8x1xf32>
    %119 = vector.broadcast %118 : vector<8x1xf32> to vector<8x64xf32>
    %120 = arith.subf %119, %114 : vector<8x64xf32>
    %121 = math.exp %120 : vector<8x64xf32>
    %122 = arith.mulf %121, %117 : vector<8x64xf32>
    %cst_20 = arith.constant dense<0.000000e+00> : vector<8xf32>
    %123 = vector.multi_reduction <add>, %120, %cst_20 [1] : vector<8x64xf32> to vector<8xf32>
    %124 = vector.shape_cast %123 : vector<8xf32> to vector<8x1xf32>
    %cst_21 = arith.constant 6.400000e+01 : f32
    %125 = vector.broadcast %cst_21 : f32 to vector<8x1xf32>
    %126 = arith.divf %124, %125 : vector<8x1xf32>
    %127 = arith.addf %100, %121 : vector<8x64xf32>
    %128 = arith.addf %101, %122 : vector<8x64xf32>
    %129 = arith.cmpf ogt, %120, %103 : vector<8x64xf32>
    %130 = arith.select %129, %107, %104 : vector<8x64xi1>, vector<8x64xf32>
    %131 = math.log %127 : vector<8x64xf32>
    %132 = arith.mulf %0, %130 : vector<8x64xf32>
    %cst_22 = arith.constant 1.000000e+00 : f32
    %133 = vector.broadcast %cst_22 : f32 to vector<8x64xf32>
    %134 = arith.subf %132, %133 : vector<8x64xf32>
    %cst_23 = arith.constant 9.99999974E-6 : f32
    %135 = vector.broadcast %cst_23 : f32 to vector<8x64xf32>
    %136 = arith.mulf %135, %130 : vector<8x64xf32>
    %cst_24 = arith.constant 1.000000e+00 : f32
    %137 = vector.broadcast %cst_24 : f32 to vector<8x64xf32>
    %138 = arith.addf %137, %136 : vector<8x64xf32>
    %139 = tpu.reciprocal %138 {approx = true} : vector<8x64xf32> -> vector<8x64xf32>
    %140 = arith.mulf %138, %139 : vector<8x64xf32>
    %cst_25 = arith.constant 2.000000e+00 : f32
    %141 = vector.broadcast %cst_25 : f32 to vector<8x64xf32>
    %142 = arith.subf %141, %140 : vector<8x64xf32>
    %143 = arith.mulf %139, %142 : vector<8x64xf32>
    %144 = arith.mulf %134, %143 : vector<8x64xf32>
    %c0_26 = arith.constant 0 : index
    %c0_27 = arith.constant 0 : index
    %145 = vector.load %arg3[%c0_26, %c0_27] : memref<8x64xf32, #tpu.memory_space<vmem>>, vector<8x64xf32>
    tpu.vector_store %arg3[%c0_26, %c0_27], %144 {strides = array<i32>} : memref<8x64xf32, #tpu.memory_space<vmem>>, vector<8x64xf32>,
    %146 = tpu.reciprocal %127 {approx = true} : vector<8x64xf32> -> vector<8x64xf32>
    %147 = arith.mulf %127, %146 : vector<8x64xf32>
    %cst_28 = arith.constant 2.000000e+00 : f32
    %148 = vector.broadcast %cst_28 : f32 to vector<8x64xf32>
    %149 = arith.subf %148, %147 : vector<8x64xf32>
    %150 = arith.mulf %146, %149 : vector<8x64xf32>
    %151 = arith.mulf %128, %150 : vector<8x64xf32>
    %152 = vector.shape_cast %151 : vector<8x64xf32> to vector<1x8x64xf32>
    %cst_29 = arith.constant dense<0.000000e+00> : vector<1xf32>
    %153 = vector.multi_reduction <add>, %152, %cst_29 [1, 2] : vector<1x8x64xf32> to vector<1xf32>
    %154 = vector.shape_cast %153 : vector<1xf32> to vector<1x1x1xf32>
    %155 = vector.extract %154[0, 0, 0] : f32 from vector<1x1x1xf32>
    %cst_30 = arith.constant dense<0.000000e+00> : vector<8xf32>
    %156 = vector.multi_reduction <add>, %131, %cst_30 [1] : vector<8x64xf32> to vector<8xf32>
    %157 = vector.shape_cast %156 : vector<8xf32> to vector<8x1xf32>
    %cst_31 = arith.constant 6.400000e+01 : f32
    %158 = vector.broadcast %cst_31 : f32 to vector<8x1xf32>
    %159 = arith.divf %157, %158 : vector<8x1xf32>
    %160 = arith.subf %50, %159 : vector<8x1xf32>
    %161 = vector.extract_strided_slice %20 {offsets = [0, 0], sizes = [8, 1], strides = [1, 1]} : vector<8x4xf32> to vector<8x1xf32>
    %162 = vector.extract_strided_slice %18 {offsets = [0, 0], sizes = [8, 1], strides = [1, 1]} : vector<8x4xf32> to vector<8x1xf32>
    %163 = arith.subf %162, %160 : vector<8x1xf32>
    %164 = arith.mulf %161, %163 : vector<8x1xf32>
    %165 = vector.shape_cast %164 : vector<8x1xf32> to vector<1x8x1xf32>
    %cst_32 = arith.constant dense<0.000000e+00> : vector<1xf32>
    %166 = vector.multi_reduction <add>, %165, %cst_32 [1, 2] : vector<1x8x1xf32> to vector<1xf32>
    %167 = vector.shape_cast %166 : vector<1xf32> to vector<1x1x1xf32>
    %168 = vector.extract %167[0, 0, 0] : f32 from vector<1x1x1xf32>
    %cst_33 = arith.constant 0.000000e+00 : f32
    %169 = arith.addf %cst_33, %168 : f32
    %170 = arith.subf %72, %159 : vector<8x1xf32>
    %171 = vector.extract_strided_slice %20 {offsets = [0, 1], sizes = [8, 1], strides = [1, 1]} : vector<8x4xf32> to vector<8x1xf32>
    %172 = vector.extract_strided_slice %18 {offsets = [0, 1], sizes = [8, 1], strides = [1, 1]} : vector<8x4xf32> to vector<8x1xf32>
    %173 = arith.subf %172, %170 : vector<8x1xf32>
    %174 = arith.mulf %171, %173 : vector<8x1xf32>
    %175 = vector.shape_cast %174 : vector<8x1xf32> to vector<1x8x1xf32>
    %cst_34 = arith.constant dense<0.000000e+00> : vector<1xf32>
    %176 = vector.multi_reduction <add>, %175, %cst_34 [1, 2] : vector<1x8x1xf32> to vector<1xf32>
    %177 = vector.shape_cast %176 : vector<1xf32> to vector<1x1x1xf32>
    %178 = vector.extract %177[0, 0, 0] : f32 from vector<1x1x1xf32>
    %179 = arith.addf %169, %178 : f32
    %180 = arith.subf %99, %159 : vector<8x1xf32>
    %181 = vector.extract_strided_slice %20 {offsets = [0, 2], sizes = [8, 1], strides = [1, 1]} : vector<8x4xf32> to vector<8x1xf32>
    %182 = vector.extract_strided_slice %18 {offsets = [0, 2], sizes = [8, 1], strides = [1, 1]} : vector<8x4xf32> to vector<8x1xf32>
    %183 = arith.subf %182, %180 : vector<8x1xf32>
    %184 = arith.mulf %181, %183 : vector<8x1xf32>
    %185 = vector.shape_cast %184 : vector<8x1xf32> to vector<1x8x1xf32>
    %cst_35 = arith.constant dense<0.000000e+00> : vector<1xf32>
    %186 = vector.multi_reduction <add>, %185, %cst_35 [1, 2] : vector<1x8x1xf32> to vector<1xf32>
    %187 = vector.shape_cast %186 : vector<1xf32> to vector<1x1x1xf32>
    %188 = vector.extract %187[0, 0, 0] : f32 from vector<1x1x1xf32>
    %189 = arith.addf %179, %188 : f32
    %190 = arith.subf %126, %159 : vector<8x1xf32>
    %191 = vector.extract_strided_slice %20 {offsets = [0, 3], sizes = [8, 1], strides = [1, 1]} : vector<8x4xf32> to vector<8x1xf32>
    %192 = vector.extract_strided_slice %18 {offsets = [0, 3], sizes = [8, 1], strides = [1, 1]} : vector<8x4xf32> to vector<8x1xf32>
    %193 = arith.subf %192, %190 : vector<8x1xf32>
    %194 = arith.mulf %191, %193 : vector<8x1xf32>
    %195 = vector.shape_cast %194 : vector<8x1xf32> to vector<1x8x1xf32>
    %cst_36 = arith.constant dense<0.000000e+00> : vector<1xf32>
    %196 = vector.multi_reduction <add>, %195, %cst_36 [1, 2] : vector<1x8x1xf32> to vector<1xf32>
    %197 = vector.shape_cast %196 : vector<1xf32> to vector<1x1x1xf32>
    %198 = vector.extract %197[0, 0, 0] : f32 from vector<1x1x1xf32>
    %199 = arith.addf %189, %198 : f32
    %cst_37 = arith.constant 5.000000e-01 : f32
    %200 = arith.mulf %199, %cst_37 : f32
    %cst_38 = arith.constant 4.8828125E-4 : f32
    %201 = arith.mulf %155, %cst_38 : f32
    %202 = arith.subf %200, %201 : f32
    %c0_39 = arith.constant 0 : index
    %203 = memref.load %arg4[%c0_39] : memref<1xf32, #tpu.memory_space<smem>>
    memref.store %202, %arg4[%c0_39] : memref<1xf32, #tpu.memory_space<smem>>
    return
  }
}

</mosaic_0001>

<llo_original>
// kernel: gmre_forward.1
$region0: #{gmre_forward.1}
  #allocation0 [shape = 'u32[]', space=smem, size = 0x4, offset = 0x4, fixed_abs, tag = 'smem constant byte address 0x4 - core index']
  #allocation1 [shape = 'u32[144,128]{1,0:T(1,128)}', space=vmem, size = 0x12000, scoped, tag = 'internal scratch']
  %s0 = inlined_call_operand.vmem [shape: f32[8,64], index: 0, kind: input, shape index: {}]
  %s1 = inlined_call_operand.vmem [shape: f32[64,12], index: 1, kind: input, shape index: {}]
  %s2 = inlined_call_operand.vmem [shape: f32[1,12], index: 2, kind: input, shape index: {}]
  %s3 = inlined_call_operand.vmem [shape: f32[8,64], index: 3, kind: output, shape index: {0}]
  %s4 = inlined_call_operand.hbm [shape: f32[1], index: 4, kind: output, shape index: {1}]
  %5 = xla_tuple %s3, %s4
  %s6 = sld [smem:[#allocation0]]
  $region30: #{gmre_forward.1} parent=0
    _
  %s8 = ssub.s32 1, %s6
  %s9 = scalar_select 0, %s8, %s6
  $region1: #{gmre_forward.1} parent=0
    #allocation2 [shape = 'u8[512]{0}', space=smem, size = 0x200, scoped, tag = 'output window, operand 1, single buffered']
    #allocation3 [shape = 's32[1]{0}', space=sflag, size = 0x4, scoped, tag = 'scoped memory for gmre_forward.1']
    %10 = vsyncpa [#allocation3], 0
    // Predicated region
    $region2: #{gmre_forward.1} parent=1 // pred_check
      _
    $region3: #{gmre_forward.1} parent=1 // pred_check_branch
      %12 = sbr.rel (0) target = $region5
    $region4: #{gmre_forward.1} parent=1 // pred_region
      _
    $region5: #{gmre_forward.1} parent=1 // pred_fallthru
      _
    // Predicated region
    $region6: #{gmre_forward.1} parent=1 // pred_check
      _
    $region7: #{gmre_forward.1} parent=1 // pred_check_branch
      %14 = sbr.rel (0) target = $region9
    $region8: #{gmre_forward.1} parent=1 // pred_region
      _
    $region9: #{gmre_forward.1} parent=1 // pred_fallthru
      _
    // Predicated region
    $region10: #{gmre_forward.1} parent=1 // pred_check
      _
    $region11: #{gmre_forward.1} parent=1 // pred_check_branch
      %16 = sbr.rel (0) target = $region13
    $region12: #{gmre_forward.1} parent=1 // pred_region
      _
    $region13: #{gmre_forward.1} parent=1 // pred_fallthru
      _
    %v17 = vld [vmem:[%s0] sm:$0xff]
    %v18 = vld [vmem:[%s1] sm:$0xff]
    %v19 = vld [vmem:[%s1 + $0x8] sm:$0xff]
    %v20 = vld [vmem:[%s1 + $0x10] sm:$0xff]
    %v21 = vld [vmem:[%s1 + $0x18] sm:$0xff]
    %v22 = vld [vmem:[%s1 + $0x20] sm:$0xff]
    %v23 = vld [vmem:[%s1 + $0x28] sm:$0xff]
    %v24 = vld [vmem:[%s1 + $0x30] sm:$0xff]
    %v25 = vld [vmem:[%s1 + $0x38] sm:$0xff]
    %v26 = vld [vmem:[%s2] sm:$0x1]
    %v28 = vlaneseq
    %v29 = vshrl.u32 %v28, 7
    %v30 = vsub.s32 0, %v29
    %v31 = vrot.slane %v26, %v30
    %vm33 = vcmask 523264
    %v35 = vsel %vm33, %v17, 0
    %37 = vmatprep.subr.mxu0 0.0
    %38 = vmatpush1.msra.mxu0 %v18
    %39 = vmatprep.subr.mxu0 0.0
    %40 = vmatpush1.msra.mxu0 %v19
    %41 = vmatprep.subr.mxu0 0.0
    %42 = vmatpush1.msra.mxu0 %v20
    %43 = vmatprep.subr.mxu0 0.0
    %44 = vmatpush1.msra.mxu0 %v21
    %45 = vmatprep.subr.mxu0 0.0
    %46 = vmatpush1.msra.mxu0 %v22
    %47 = vmatprep.subr.mxu0 0.0
    %48 = vmatpush1.msra.mxu0 %v23
    %49 = vmatprep.subr.mxu0 0.0
    %50 = vmatpush1.msra.mxu0 %v24
    %51 = vmatprep.subr.mxu0 0.0
    %52 = vmatpush1.msra.mxu0 %v25
    %53 = vmatprep.subr.mxu0 0.0
    %54 = vmatpush1.msra.mxu0 0.0
    %55 = vmatprep.subr.mxu0 0.0
    %56 = vmatpush1.msra.mxu0 0.0
    %57 = vmatprep.subr.mxu0 0.0
    %58 = vmatpush1.msra.mxu0 0.0
    %59 = vmatprep.subr.mxu0 0.0
    %60 = vmatpush1.msra.mxu0 0.0
    %61 = vmatprep.subr.mxu0 0.0
    %62 = vmatpush1.msra.mxu0 0.0
    %63 = vmatprep.subr.mxu0 0.0
    %64 = vmatpush1.msra.mxu0 0.0
    %65 = vmatprep.subr.mxu0 0.0
    %66 = vmatpush1.msra.mxu0 0.0
    %67 = vmatprep.subr.mxu0 0.0
    %68 = vmatpush1.msra.mxu0 0.0
    %69 = vmatprep.subr.mxu0 0.0
    %70 = vmatpush1.msra.mxu0 0.0
    %71 = vmatprep.subr.mxu0 0.0
    %72 = vmatpush1.msra.mxu0 0.0
    %73 = vmatprep.subr.mxu0 0.0
    %74 = vmatpush1.msra.mxu0 0.0
    %75 = vmatprep.subr.mxu0 0.0
    %76 = vmatpush1.msra.mxu0 0.0
    %77 = vmatprep.subr.mxu0 0.0
    %78 = vmatpush1.msra.mxu0 0.0
    %79 = vmatprep.subr.mxu0 0.0
    %80 = vmatpush1.msra.mxu0 0.0
    %81 = vmatprep.subr.mxu0 0.0
    %82 = vmatpush1.msra.mxu0 0.0
    %83 = vmatprep.subr.mxu0 0.0
    %84 = vmatpush1.msra.mxu0 0.0
    %85 = vmatprep.subr.mxu0 0.0
    %86 = vmatpush1.msra.mxu0 0.0
    %87 = vmatprep.subr.mxu0 0.0
    %88 = vmatpush1.msra.mxu0 0.0
    %89 = vmatprep.subr.mxu0 0.0
    %90 = vmatpush1.msra.mxu0 0.0
    %91 = vmatprep.subr.mxu0 0.0
    %92 = vmatpush1.msra.mxu0 0.0
    %93 = vmatprep.subr.mxu0 0.0
    %94 = vmatpush1.msra.mxu0 0.0
    %95 = vmatprep.subr.mxu0 0.0
    %96 = vmatpush1.msra.mxu0 0.0
    %97 = vmatprep.subr.mxu0 0.0
    %98 = vmatpush1.msra.mxu0 0.0
    %99 = vmatprep.subr.mxu0 0.0
    %100 = vmatpush1.msra.mxu0 0.0
    %101 = vmatprep.mubr.f32.mxu0 0.0
    %102 = vmatmul.mubr.f32.gmra.mrb[0].mxu0 %v35
    %v103 = vpop.f32.mrb[0].mxu0
    %v104 = vadd.f32 %v31, %v103
    %v105 = vpop.f32.mrb[0].mxu0
    %106 = vdwg.mxu0
    %vm107 = vcmask 31744
    %v108 = vsel %vm107, %v104, -inf
    %109 = vmax.xlane.f32.xlu0 %v108
    %v110 = vpop.xlane.xlu0 %109
    %v111 = vsub.f32 %v104, %v110
    %v112 = vmul.f32 %v111, 1.442695
    %v113 = vpow.pop %v112
    %v114 = vsel %vm107, %v113, 0.0
    %115 = vadd.xlane.f32.xlu0 %v114
    %v116 = vpop.xlane.xlu0 %115
    %v117 = vlog2.pop %v116
    %v118 = vmul.f32 %v117, 0.6931472
    %v119 = vsub.f32 %v111, %v118
    %v120 = vrcp.pop %v116
    %v121 = vmul.f32 %v113, %v120
    %v122 = vsub.f32 0.0, %v104
    %v123 = vmul.f32 %v122, 1.442695
    %v124 = vpow.pop %v123
    %v125 = vsub.f32 %v122, 0.9189385
    %127 = vrot.lane.b32.xlu0 %v119, 4
    %v128 = vpop.permute.xlu0 %127
    %v130 = vadd.f32 %v125, %v128
    %132 = vset.pattern.permute.xlu0 4
    %133 = vperm.xlu0 %132, %v124
    %v134 = vpop.permute.xlu0 %133
    %137 = vset.pattern.permute.xlu0 8
    %138 = vperm.xlu0 %137, %v104
    %v139 = vpop.permute.xlu0 %138
    %v141 = vsub.f32 %v17, %v139
    %v142 = vmul.f32 %v141, %v134
    %v143 = vmul.f32 %v142, 0.5
    %v144 = vmul.f32 %v143, %v142
    %146 = vset.pattern.permute.xlu0 4
    %147 = vperm.xlu0 %146, %v125
    %v148 = vpop.permute.xlu0 %147
    %v150 = vsub.f32 %v148, %v144
    %152 = vset.pattern.permute.xlu0 4
    %153 = vperm.xlu0 %152, %v130
    %v154 = vpop.permute.xlu0 %153
    %v156 = vsub.f32 %v154, %v144
    %v157 = vmul.f32 %v156, 1.442695
    %v158 = vpow.pop %v157
    %v159 = vmul.f32 %v158, %v150
    %v160 = vsel %vm33, %v156, 0.0
    %161 = vadd.xlane.f32.xlu0 %v160
    %v162 = vpop.xlane.xlu0 %161
    %v163 = vrcp.pop 64.0
    %v164 = vmul.f32 %v162, %v163
    %165 = vset.pattern.permute.xlu0 5
    %166 = vperm.xlu0 %165, %v124
    %v167 = vpop.permute.xlu0 %166
    %169 = vset.pattern.permute.xlu0 9
    %170 = vperm.xlu0 %169, %v104
    %v171 = vpop.permute.xlu0 %170
    %v173 = vsub.f32 %v17, %v171
    %v174 = vmul.f32 %v173, %v167
    %v175 = vmul.f32 %v174, 0.5
    %v176 = vmul.f32 %v175, %v174
    %177 = vset.pattern.permute.xlu0 5
    %178 = vperm.xlu0 %177, %v125
    %v179 = vpop.permute.xlu0 %178
    %v181 = vsub.f32 %v179, %v176
    %182 = vset.pattern.permute.xlu0 5
    %183 = vperm.xlu0 %182, %v130
    %v184 = vpop.permute.xlu0 %183
    %v186 = vsub.f32 %v184, %v176
    %v187 = vmul.f32 %v186, 1.442695
    %v188 = vpow.pop %v187
    %v189 = vmul.f32 %v188, %v181
    %v190 = vsel %vm33, %v186, 0.0
    %191 = vadd.xlane.f32.xlu0 %v190
    %v192 = vpop.xlane.xlu0 %191
    %v193 = vmul.f32 %v192, %v163
    %v194 = vadd.f32 %v158, %v188
    %v195 = vadd.f32 %v159, %v189
    %vm196 = vcmp.gt.f32.partialorder %v186, %v156
    %v197 = vsel %vm196, %v186, %v156
    %v198 = vsel %vm196, %v167, %v134
    %199 = vset.pattern.permute.xlu0 6
    %200 = vperm.xlu0 %199, %v124
    %v201 = vpop.permute.xlu0 %200
    %203 = vset.pattern.permute.xlu0 10
    %204 = vperm.xlu0 %203, %v104
    %v205 = vpop.permute.xlu0 %204
    %v207 = vsub.f32 %v17, %v205
    %v208 = vmul.f32 %v207, %v201
    %v209 = vmul.f32 %v208, 0.5
    %v210 = vmul.f32 %v209, %v208
    %211 = vset.pattern.permute.xlu0 6
    %212 = vperm.xlu0 %211, %v125
    %v213 = vpop.permute.xlu0 %212
    %v215 = vsub.f32 %v213, %v210
    %216 = vset.pattern.permute.xlu0 6
    %217 = vperm.xlu0 %216, %v130
    %v218 = vpop.permute.xlu0 %217
    %v220 = vsub.f32 %v218, %v210
    %v221 = vmul.f32 %v220, 1.442695
    %v222 = vpow.pop %v221
    %v223 = vmul.f32 %v222, %v215
    %v224 = vsel %vm33, %v220, 0.0
    %225 = vadd.xlane.f32.xlu0 %v224
    %v226 = vpop.xlane.xlu0 %225
    %v227 = vmul.f32 %v226, %v163
    %v228 = vadd.f32 %v194, %v222
    %v229 = vadd.f32 %v195, %v223
    %vm230 = vcmp.gt.f32.partialorder %v220, %v197
    %v231 = vsel %vm230, %v220, %v197
    %v232 = vsel %vm230, %v201, %v198
    %233 = vset.pattern.permute.xlu0 7
    %234 = vperm.xlu0 %233, %v124
    %v235 = vpop.permute.xlu0 %234
    %237 = vset.pattern.permute.xlu0 11
    %238 = vperm.xlu0 %237, %v104
    %v239 = vpop.permute.xlu0 %238
    %v241 = vsub.f32 %v17, %v239
    %v242 = vmul.f32 %v241, %v235
    %v243 = vmul.f32 %v242, 0.5
    %v244 = vmul.f32 %v243, %v242
    %245 = vset.pattern.permute.xlu0 7
    %246 = vperm.xlu0 %245, %v125
    %v247 = vpop.permute.xlu0 %246
    %v249 = vsub.f32 %v247, %v244
    %250 = vset.pattern.permute.xlu0 7
    %251 = vperm.xlu0 %250, %v130
    %v252 = vpop.permute.xlu0 %251
    %v254 = vsub.f32 %v252, %v244
    %v255 = vmul.f32 %v254, 1.442695
    %v256 = vpow.pop %v255
    %v257 = vmul.f32 %v256, %v249
    %v258 = vsel %vm33, %v254, 0.0
    %259 = vadd.xlane.f32.xlu0 %v258
    %v260 = vpop.xlane.xlu0 %259
    %v261 = vmul.f32 %v260, %v163
    %v262 = vadd.f32 %v228, %v256
    %v263 = vadd.f32 %v229, %v257
    %vm264 = vcmp.gt.f32.partialorder %v254, %v231
    %v265 = vsel %vm264, %v235, %v232
    %v266 = vlog2.pop %v262
    %v267 = vmul.f32 %v266, 0.6931472
    %v268 = vmul.f32 %v17, %v265
    %v269 = vsub.f32 %v268, 1.0
    %v270 = vmul.f32 %v265, 1e-05
    %v271 = vadd.f32 %v270, 1.0
    %v272 = vrcp.pop %v271
    %v273 = vmul.f32 %v271, %v272
    %v274 = vsub.f32 2.0, %v273
    %v275 = vmul.f32 %v272, %v274
    %v276 = vmul.f32 %v269, %v275
    %277 = vst.msk [vmem:[%s3] sm:$0xff] %vm33, %v276
    %v278 = vrcp.pop %v262
    %v279 = vmul.f32 %v262, %v278
    %v280 = vsub.f32 2.0, %v279
    %v281 = vmul.f32 %v278, %v280
    %v282 = vmul.f32 %v263, %v281
    %v283 = vsel %vm33, %v282, 0.0
    %284 = vadd.xlane.f32.xlu0 %v283
    %v285 = vpop.xlane.xlu0 %284
    %v286 = vrot.slane %v285, 4
    %v287 = vadd.f32 %v285, %v286
    %v288 = vrot.slane %v287, 2
    %v289 = vadd.f32 %v287, %v288
    %v290 = vrot.slane %v289, 1
    %v291 = vadd.f32 %v289, %v290
    %s292 = vtos %v291
    %v293 = vsel %vm33, %v267, 0.0
    %294 = vadd.xlane.f32.xlu0 %v293
    %v295 = vpop.xlane.xlu0 %294
    %v296 = vmul.f32 %v295, %v163
    %v297 = vsub.f32 %v164, %v296
    %v298 = vsub.f32 %v119, %v297
    %v299 = vmul.f32 %v121, %v298
    %vm300 = vcmask 7168
    %v301 = vsel %vm300, %v299, 0.0
    %302 = vadd.xlane.f32.xlu0 %v301
    %v303 = vpop.xlane.xlu0 %302
    %v304 = vrot.slane %v303, 4
    %v305 = vadd.f32 %v303, %v304
    %v306 = vrot.slane %v305, 2
    %v307 = vadd.f32 %v305, %v306
    %v308 = vrot.slane %v307, 1
    %v309 = vadd.f32 %v307, %v308
    %s310 = vtos %v309
    %s311 = sadd.f32 %s310, 0.0
    %v312 = vsub.f32 %v193, %v296
    %v313 = vsub.f32 %v119, %v312
    %v314 = vmul.f32 %v121, %v313
    %316 = vrot.lane.b32.xlu0 %v314, 127
    %v317 = vpop.permute.xlu0 %316
    %v319 = vsel %vm300, %v317, 0.0
    %320 = vadd.xlane.f32.xlu0 %v319
    %v321 = vpop.xlane.xlu0 %320
    %v322 = vrot.slane %v321, 4
    %v323 = vadd.f32 %v321, %v322
    %v324 = vrot.slane %v323, 2
    %v325 = vadd.f32 %v323, %v324
    %v326 = vrot.slane %v325, 1
    %v327 = vadd.f32 %v325, %v326
    %s328 = vtos %v327
    %s329 = sadd.f32 %s311, %s328
    %v330 = vsub.f32 %v227, %v296
    %v331 = vsub.f32 %v119, %v330
    %v332 = vmul.f32 %v121, %v331
    %334 = vrot.lane.b32.xlu0 %v332, 126
    %v335 = vpop.permute.xlu0 %334
    %v337 = vsel %vm300, %v335, 0.0
    %338 = vadd.xlane.f32.xlu0 %v337
    %v339 = vpop.xlane.xlu0 %338
    %v340 = vrot.slane %v339, 4
    %v341 = vadd.f32 %v339, %v340
    %v342 = vrot.slane %v341, 2
    %v343 = vadd.f32 %v341, %v342
    %v344 = vrot.slane %v343, 1
    %v345 = vadd.f32 %v343, %v344
    %s346 = vtos %v345
    %s347 = sadd.f32 %s329, %s346
    %v348 = vsub.f32 %v261, %v296
    %v349 = vsub.f32 %v119, %v348
    %v350 = vmul.f32 %v121, %v349
    %352 = vrot.lane.b32.xlu0 %v350, 125
    %v353 = vpop.permute.xlu0 %352
    %v355 = vsel %vm300, %v353, 0.0
    %356 = vadd.xlane.f32.xlu0 %v355
    %v357 = vpop.xlane.xlu0 %356
    %v358 = vrot.slane %v357, 4
    %v359 = vadd.f32 %v357, %v358
    %v360 = vrot.slane %v359, 2
    %v361 = vadd.f32 %v359, %v360
    %v362 = vrot.slane %v361, 1
    %v363 = vadd.f32 %v361, %v362
    %s364 = vtos %v363
    %s365 = sadd.f32 %s347, %s364
    %s366 = smul.f32 %s365, 0.5
    %s367 = smul.f32 %s292, 0.00048828125
    %s368 = ssub.f32 %s366, %s367
    %s369 = scalar_lea.smem [#allocation2], 0
    %370 = sst [smem:[%s369]] %s368
    // Predicated region
    $region14: #{gmre_forward.1} parent=1 // pred_check
      _
    $region15: #{gmre_forward.1} parent=1 // pred_check_branch
      %372 = sbr.rel (0) target = $region17
    $region16: #{gmre_forward.1} parent=1 // pred_region
      _
    $region17: #{gmre_forward.1} parent=1 // pred_fallthru
      _
    // Predicated region
    $region18: #{gmre_forward.1} parent=1 // pred_check
      _
    $region19: #{gmre_forward.1} parent=1 // pred_check_branch
      %374 = sbr.rel (0) target = $region21
    $region20: #{gmre_forward.1} parent=1 // pred_region
      %s376 = ssub.s32 16, 16
      %377 = vsyncadd [#allocation3], %s376
      %380 = dma.smem_to_hbm [#allocation2], 16, %s4, [#allocation3]
    $region21: #{gmre_forward.1} parent=1 // pred_fallthru
      _
    // Predicated region
    $region22: #{gmre_forward.1} parent=1 // pred_check
      _
    $region23: #{gmre_forward.1} parent=1 // pred_check_branch
      %382 = sbr.rel (0) target = $region25
    $region24: #{gmre_forward.1} parent=1 // pred_region
      _
    $region25: #{gmre_forward.1} parent=1 // pred_fallthru
      _
    // Predicated region
    $region26: #{gmre_forward.1} parent=1 // pred_check
      _
    $region27: #{gmre_forward.1} parent=1 // pred_check_branch
      %384 = sbr.rel (0) target = $region29
    $region28: #{gmre_forward.1} parent=1 // pred_region
      %385 = dma.done [#allocation3], 16
    $region29: #{gmre_forward.1} parent=1 // pred_fallthru
      _
    %386 = sfence
    %387 = vsyncpa [#allocation3], 1

</llo_original>
